<compile_context>
chip_gen: v5e
topology: v5e:2x2
jax: 0.10.0
libtpu: 0.0.40
codegen_flags: <defaults>
</compile_context>

<pallas_src>
import functools

import jax
import jax.numpy as jnp
from jax.experimental import pallas as pl
from jax.experimental.pallas import tpu as pltpu


_VMEM_TILE_BUDGET = 2 * 1024 * 1024   # bytes per input tile (x2 for double buffering)
_MAX_ROW_TILE = 1024


def _nce_loss_kernel(x_ref, loss_ref, m_sc, l_sc, x0_sc, *, tc, n_cls, need_col_mask):
    """One (row_tile, class_tile) block; online logsumexp over the class axis."""
    k = pl.program_id(1)

    @pl.when(k == 0)
    def _init():
        m_sc[...] = jnp.full_like(m_sc, -jnp.inf)
        l_sc[...] = jnp.zeros_like(l_sc)
        # Target class is always index 0 -> lives in the first class tile.
        x0_sc[...] = x_ref[:, 0:1].astype(jnp.float32)

    x = x_ref[...].astype(jnp.float32)            # (tb, tc)
    if need_col_mask:
        # Last class tile may hang over n_cls; mask padded lanes to -inf.
        col = k * tc + jax.lax.broadcasted_iota(jnp.int32, x.shape, 1)
        x = jnp.where(col < n_cls, x, -jnp.inf)

    m_prev = m_sc[...]
    m_new = jnp.maximum(m_prev, jnp.max(x, axis=-1, keepdims=True))
    alpha = jnp.exp(m_prev - m_new)               # 0 on the first tile (m_prev = -inf)
    l_sc[...] = alpha * l_sc[...] + jnp.sum(jnp.exp(x - m_new), axis=-1, keepdims=True)
    m_sc[...] = m_new

    @pl.when(k == pl.num_programs(1) - 1)
    def _finalize():
        # per-row loss = logsumexp(x) - x[:, 0]
        loss_ref[...] = m_sc[...] + jnp.log(l_sc[...]) - x0_sc[...]


def _pick_tiles(bsz, n_cls, itemsize):
    """Choose (row_tile, class_tile) within a per-buffer VMEM budget."""
    # Path 1: keep the whole class (lane) dim in a single tile if it fits.
    rows = _VMEM_TILE_BUDGET // max(1, n_cls * itemsize)
    if rows >= 8:
        tb = int(min(rows, _MAX_ROW_TILE, bsz))
        if tb < bsz:
            tb = max(8, (tb // 16) * 16)          # multiple of 16 (bf16 sublane packing)
        return tb, n_cls
    # Path 2: class dim too wide -> few rows, tile the class dim (online logsumexp).
    tb = 16 if itemsize < 4 else 8
    tb = min(tb, bsz)
    tc = _VMEM_TILE_BUDGET // max(1, tb * itemsize)
    tc = max(128, (tc // 128) * 128)
    if tc >= n_cls:
        return tb, n_cls
    return tb, tc


def nce_softmax_loss(x, *, use_pallas=None, row_tile=None, class_tile=None):
    """x: (bsz, n_cls) logits (f32 or bf16). Returns scalar f32 loss."""
    bsz, n_cls = x.shape

    if use_pallas is None:
        # Tiny problems are pure launch overhead -> let XLA fuse them.
        use_pallas = (bsz * n_cls) >= 32 * 1024
    if not use_pallas:
        logp = jax.nn.log_softmax(x.astype(jnp.float32), axis=-1)
        return -jnp.mean(logp[:, 0])

    itemsize = jnp.dtype(x.dtype).itemsize
    tb, tc = _pick_tiles(bsz, n_cls, itemsize)
    if row_tile is not None:
        tb = min(int(row_tile), bsz)
    if class_tile is not None:
        tc = min(int(class_tile), n_cls)

    grid_b = pl.cdiv(bsz, tb)
    grid_c = pl.cdiv(n_cls, tc)
    need_col_mask = (grid_c > 1) and (n_cls % tc != 0)

    kernel = functools.partial(
        _nce_loss_kernel, tc=tc, n_cls=n_cls, need_col_mask=need_col_mask)

    per_row = pl.pallas_call(
        kernel,
        out_shape=jax.ShapeDtypeStruct((grid_b * tb, 1), jnp.float32),
        grid=(grid_b, grid_c),
        in_specs=[pl.BlockSpec((tb, tc), lambda i, k: (i, k))],
        out_specs=pl.BlockSpec((tb, 1), lambda i, k: (i, 0)),
        scratch_shapes=[pltpu.VMEM((tb, 1), jnp.float32)] * 3,  # m, l, x0
        compiler_params=pltpu.CompilerParams(
            dimension_semantics=("parallel", "arbitrary"),
            vmem_limit_bytes=32 * 1024 * 1024,
        ),
    )(x)

    # Mean over the true batch (padded tail rows are sliced off); multiply by
    # a precomputed 1/bsz instead of dividing.
    return jnp.sum(per_row[:bsz, 0]) * jnp.float32(1.0 / bsz)


def _reference_loss(x):
    # Pure-JAX reference: CrossEntropyLoss with all-zero targets.
    logp = jax.nn.log_softmax(x.astype(jnp.float32), axis=-1)
    return -jnp.mean(logp[:, 0])


if __name__ == "__main__":
    key = jax.random.PRNGKey(0)
    k0, k1, k2 = jax.random.split(key, 3)

    # 1) Small (bsz, n_cls) logits: single-tile fast path (grid = (1, 1)).
    x0 = jax.random.normal(k0, (16, 384), dtype=jnp.float32)
    out0 = nce_softmax_loss(x0, use_pallas=True)
    jax.block_until_ready(out0)
    ref0 = _reference_loss(x0)
    assert jnp.allclose(out0, ref0, atol=1e-5, rtol=1e-5), (out0, ref0)

    # 2) Batch + class tiling (online logsumexp) with ragged batch & class tails.
    x1 = jax.random.normal(k1, (20, 320), dtype=jnp.float32)
    out1 = nce_softmax_loss(x1, use_pallas=True, row_tile=8, class_tile=128)
    jax.block_until_ready(out1)
    ref1 = _reference_loss(x1)
    assert jnp.allclose(out1, ref1, atol=1e-5, rtol=1e-5), (out1, ref1)

    # 3) bf16 logits in HBM, upcast inside the kernel, class-tiled.
    x2 = jax.random.normal(k2, (16, 512), dtype=jnp.bfloat16)
    out2 = nce_softmax_loss(x2, use_pallas=True, row_tile=16, class_tile=128)
    jax.block_until_ready(out2)
    ref2 = _reference_loss(x2)
    assert jnp.allclose(out2, ref2, atol=1e-4, rtol=1e-4), (out2, ref2)

    print("KERNEL_OK")
</pallas_src>

<mosaic_0001>
module attributes {stable_mosaic.version = 11 : i64} {
  func.func @_nce_loss_kernel(%arg0: i32, %arg1: i32, %arg2: memref<16x384xf32, #tpu.memory_space<vmem>>, %arg3: memref<16x1xf32, #tpu.memory_space<vmem>>, %arg4: memref<16x1xf32, #tpu.memory_space<vmem>>, %arg5: memref<16x1xf32, #tpu.memory_space<vmem>>, %arg6: memref<16x1xf32, #tpu.memory_space<vmem>>) attributes {dimension_semantics = [#tpu.dimension_semantics<parallel>, #tpu.dimension_semantics<arbitrary>], iteration_bounds = array<i64: 1, 1>, scalar_prefetch = 0 : i64, scratch_operands = 3 : i64, tpu.core_type = #tpu.core_type<tc>, window_params = [{transform_indices = @transform_0, window_bounds = array<i64: 16, 384>}, {transform_indices = @transform_1, window_bounds = array<i64: 16, 1>}]} {
    %c0_i32 = arith.constant 0 : i32
    %0 = arith.cmpi eq, %arg1, %c0_i32 : i32
    %1 = arith.extui %0 : i1 to i32
    %c0_i32_0 = arith.constant 0 : i32
    %2 = arith.cmpi ne, %1, %c0_i32_0 : i32
    scf.if %2 {
      %cst_13 = arith.constant 0xFF800000 : f32
      %23 = vector.broadcast %cst_13 : f32 to vector<16x1xf32>
      %c0_14 = arith.constant 0 : index
      %c0_15 = arith.constant 0 : index
      %24 = vector.load %arg4[%c0_14, %c0_15] : memref<16x1xf32, #tpu.memory_space<vmem>>, vector<16x1xf32>
      tpu.vector_store %arg4[%c0_14, %c0_15], %23 {strides = array<i32>} : memref<16x1xf32, #tpu.memory_space<vmem>>, vector<16x1xf32>,
      %cst_16 = arith.constant 0.000000e+00 : f32
      %25 = vector.broadcast %cst_16 : f32 to vector<16x1xf32>
      %c0_17 = arith.constant 0 : index
      %c0_18 = arith.constant 0 : index
      %26 = vector.load %arg5[%c0_17, %c0_18] : memref<16x1xf32, #tpu.memory_space<vmem>>, vector<16x1xf32>
      tpu.vector_store %arg5[%c0_17, %c0_18], %25 {strides = array<i32>} : memref<16x1xf32, #tpu.memory_space<vmem>>, vector<16x1xf32>,
      %c0_19 = arith.constant 0 : index
      %c0_20 = arith.constant 0 : index
      %27 = vector.load %arg2[%c0_19, %c0_20] : memref<16x384xf32, #tpu.memory_space<vmem>>, vector<16x1xf32>
      %c0_21 = arith.constant 0 : index
      %c0_22 = arith.constant 0 : index
      %28 = vector.load %arg6[%c0_21, %c0_22] : memref<16x1xf32, #tpu.memory_space<vmem>>, vector<16x1xf32>
      tpu.vector_store %arg6[%c0_21, %c0_22], %27 {strides = array<i32>} : memref<16x1xf32, #tpu.memory_space<vmem>>, vector<16x1xf32>,
    } else {
    }
    %c0 = arith.constant 0 : index
    %c0_1 = arith.constant 0 : index
    %3 = vector.load %arg2[%c0, %c0_1] : memref<16x384xf32, #tpu.memory_space<vmem>>, vector<16x384xf32>
    %c0_2 = arith.constant 0 : index
    %c0_3 = arith.constant 0 : index
    %4 = vector.load %arg4[%c0_2, %c0_3] : memref<16x1xf32, #tpu.memory_space<vmem>>, vector<16x1xf32>
    %cst = arith.constant dense<0xFF800000> : vector<16xf32>
    %5 = vector.multi_reduction <maximumf>, %3, %cst [1] : vector<16x384xf32> to vector<16xf32>
    %6 = vector.shape_cast %5 : vector<16xf32> to vector<16x1xf32>
    %7 = arith.maximumf %4, %6 : vector<16x1xf32>
    %8 = arith.subf %4, %7 : vector<16x1xf32>
    %9 = math.exp %8 : vector<16x1xf32>
    %c0_4 = arith.constant 0 : index
    %c0_5 = arith.constant 0 : index
    %10 = vector.load %arg5[%c0_4, %c0_5] : memref<16x1xf32, #tpu.memory_space<vmem>>, vector<16x1xf32>
    %11 = arith.mulf %9, %10 : vector<16x1xf32>
    %12 = vector.broadcast %7 : vector<16x1xf32> to vector<16x384xf32>
    %13 = arith.subf %3, %12 : vector<16x384xf32>
    %14 = math.exp %13 : vector<16x384xf32>
    %cst_6 = arith.constant dense<0.000000e+00> : vector<16xf32>
    %15 = vector.multi_reduction <add>, %14, %cst_6 [1] : vector<16x384xf32> to vector<16xf32>
    %16 = vector.shape_cast %15 : vector<16xf32> to vector<16x1xf32>
    %17 = arith.addf %11, %16 : vector<16x1xf32>
    %c0_7 = arith.constant 0 : index
    %c0_8 = arith.constant 0 : index
    %18 = vector.load %arg5[%c0_7, %c0_8] : memref<16x1xf32, #tpu.memory_space<vmem>>, vector<16x1xf32>
    tpu.vector_store %arg5[%c0_7, %c0_8], %17 {strides = array<i32>} : memref<16x1xf32, #tpu.memory_space<vmem>>, vector<16x1xf32>,
    %c0_9 = arith.constant 0 : index
    %c0_10 = arith.constant 0 : index
    %19 = vector.load %arg4[%c0_9, %c0_10] : memref<16x1xf32, #tpu.memory_space<vmem>>, vector<16x1xf32>
    tpu.vector_store %arg4[%c0_9, %c0_10], %7 {strides = array<i32>} : memref<16x1xf32, #tpu.memory_space<vmem>>, vector<16x1xf32>,
    %c0_i32_11 = arith.constant 0 : i32
    %20 = arith.cmpi eq, %arg1, %c0_i32_11 : i32
    %21 = arith.extui %20 : i1 to i32
    %c0_i32_12 = arith.constant 0 : i32
    %22 = arith.cmpi ne, %21, %c0_i32_12 : i32
    scf.if %22 {
      %c0_13 = arith.constant 0 : index
      %c0_14 = arith.constant 0 : index
      %23 = vector.load %arg4[%c0_13, %c0_14] : memref<16x1xf32, #tpu.memory_space<vmem>>, vector<16x1xf32>
      %c0_15 = arith.constant 0 : index
      %c0_16 = arith.constant 0 : index
      %24 = vector.load %arg5[%c0_15, %c0_16] : memref<16x1xf32, #tpu.memory_space<vmem>>, vector<16x1xf32>
      %25 = math.log %24 : vector<16x1xf32>
      %26 = arith.addf %23, %25 : vector<16x1xf32>
      %c0_17 = arith.constant 0 : index
      %c0_18 = arith.constant 0 : index
      %27 = vector.load %arg6[%c0_17, %c0_18] : memref<16x1xf32, #tpu.memory_space<vmem>>, vector<16x1xf32>
      %28 = arith.subf %26, %27 : vector<16x1xf32>
      %c0_19 = arith.constant 0 : index
      %c0_20 = arith.constant 0 : index
      %29 = vector.load %arg3[%c0_19, %c0_20] : memref<16x1xf32, #tpu.memory_space<vmem>>, vector<16x1xf32>
      tpu.vector_store %arg3[%c0_19, %c0_20], %28 {strides = array<i32>} : memref<16x1xf32, #tpu.memory_space<vmem>>, vector<16x1xf32>,
    } else {
    }
    return
  }
  func.func @transform_0(%arg0: i32, %arg1: i32) -> (i32, i32) {
    %c0_i32 = arith.constant 0 : i32
    return %arg0, %arg1 : i32, i32
  }
  func.func @transform_1(%arg0: i32, %arg1: i32) -> (i32, i32) {
    %c0_i32 = arith.constant 0 : i32
    %c0_i32_0 = arith.constant 0 : i32
    return %arg0, %c0_i32 : i32, i32
  }
}

</mosaic_0001>

<llo_original>
// kernel: tpu_custom_call.1
$region0: #{tpu_custom_call.1}
  #allocation0 [shape = 'u32[]', space=smem, size = 0x4, offset = 0x4, fixed_abs, tag = 'smem constant byte address 0x4 - core index']
  #allocation1 [shape = 'u32[72,128]{1,0:T(1,128)}', space=vmem, size = 0x9000, scoped, tag = 'internal scratch']
  #allocation2 [shape = 'f32[16,1]{1,0:T(8,128)}', space=vmem, size = 0x2000, scoped, tag = 'scratch operand']
  #allocation3 [shape = 'f32[16,1]{1,0:T(8,128)}', space=vmem, size = 0x2000, scoped, tag = 'scratch operand']
  #allocation4 [shape = 'f32[16,1]{1,0:T(8,128)}', space=vmem, size = 0x2000, scoped, tag = 'scratch operand']
  %s0 = inlined_call_operand.hbm [shape: f32[16,384], index: 0, kind: input, shape index: {}]
  %s1 = inlined_call_operand.vmem [shape: f32[16,1], index: 1, kind: output, shape index: {}]
  %s2 = sld [smem:[#allocation0]]
  $region26: #{tpu_custom_call.1} parent=0
    _
  %s4 = ssub.s32 1, %s2
  %s5 = scalar_select 0, %s4, %s2
  $region1: #{tpu_custom_call.1} parent=0
    #allocation5 [shape = 'u8[24576]{0}', space=vmem, size = 0x6000, scoped, tag = 'input window, operand 0, single buffered']
    #allocation6 [shape = 's32[1]{0}', space=sflag, size = 0x4, scoped, tag = 'scoped memory for tpu_custom_call.1']
    %6 = vsyncpa [#allocation6], 0
    // Predicated region
    $region2: #{tpu_custom_call.1} parent=1 // pred_check
      _
    $region3: #{tpu_custom_call.1} parent=1 // pred_check_branch
      %8 = sbr.rel (0) target = $region5
    $region4: #{tpu_custom_call.1} parent=1 // pred_region
      %10 = vsyncadd [#allocation6], 0
      %s11 = sshll.u32 %s0, 4
      %s12 = int_to_ptr.hbm [resolvable:$true] %s11
      %s13 = sshll.u32 [#allocation5], 4
      %s14 = int_to_ptr.vmem [resolvable:$true] %s13
      %19 = dma.hbm_to_vmem [thread:$0]  %s12, 768, %s14, [#allocation6], 384, 384, 24
    $region5: #{tpu_custom_call.1} parent=1 // pred_fallthru
      _
    // Predicated region
    $region6: #{tpu_custom_call.1} parent=1 // pred_check
      _
    $region7: #{tpu_custom_call.1} parent=1 // pred_check_branch
      %21 = sbr.rel (0) target = $region9
    $region8: #{tpu_custom_call.1} parent=1 // pred_region
      %23 = dma.done [#allocation6], 768
    $region9: #{tpu_custom_call.1} parent=1 // pred_fallthru
      _
    %p24 = scmp.eq.s32.totalorder 0, 0
    // Predicated region
    $region10: #{tpu_custom_call.1} parent=1 // pred_check
      %p25 = pneg %p24
    $region11: #{tpu_custom_call.1} parent=1 // pred_check_branch
      %27 = sbr.rel (%p25) target = $region13
    $region12: #{tpu_custom_call.1} parent=1 // pred_region
      %vm28 = vcmask 7168
      %29 = vst.msk [vmem:[#allocation2] sm:$0xff] %vm28, -inf
      %30 = vst.msk [vmem:[#allocation2 + $0x8] sm:$0xff] %vm28, -inf
      %31 = vst.msk [vmem:[#allocation3] sm:$0xff] %vm28, 0.0
      %32 = vst.msk [vmem:[#allocation3 + $0x8] sm:$0xff] %vm28, 0.0
      %v33 = vld [vmem:[#allocation5] sm:$0xff]
      %v34 = vld [vmem:[#allocation5 + $0x18] sm:$0xff]
      %35 = vst.msk [vmem:[#allocation4] sm:$0xff] %vm28, %v33
      %36 = vst.msk [vmem:[#allocation4 + $0x8] sm:$0xff] %vm28, %v34
    $region13: #{tpu_custom_call.1} parent=1 // pred_fallthru
      _
    %v37 = vld [vmem:[#allocation5] sm:$0xff]
    %v38 = vld [vmem:[#allocation5 + $0x8] sm:$0xff]
    %v39 = vld [vmem:[#allocation5 + $0x10] sm:$0xff]
    %v40 = vld [vmem:[#allocation5 + $0x18] sm:$0xff]
    %v41 = vld [vmem:[#allocation5 + $0x20] sm:$0xff]
    %v42 = vld [vmem:[#allocation5 + $0x28] sm:$0xff]
    %v43 = vld [vmem:[#allocation2] sm:$0xff]
    %v44 = vld [vmem:[#allocation2 + $0x8] sm:$0xff]
    %v45 = vmax.f32 %v37, %v39
    %v46 = vmax.f32 %v45, %v38
    %47 = vmax.xlane.f32.xlu0 %v46
    %v48 = vpop.xlane.xlu0 %47
    %v49 = vmax.f32 %v40, %v42
    %v50 = vmax.f32 %v49, %v41
    %51 = vmax.xlane.f32.xlu0 %v50
    %v52 = vpop.xlane.xlu0 %51
    %v53 = vmax.f32 %v43, %v48
    %v54 = vmax.f32 %v44, %v52
    %v55 = vsub.f32 %v43, %v53
    %v56 = vsub.f32 %v44, %v54
    %v57 = vmul.f32 %v55, 1.442695
    %v58 = vpow.pop %v57
    %v59 = vmul.f32 %v56, 1.442695
    %v60 = vpow.pop %v59
    %v61 = vld [vmem:[#allocation3] sm:$0xff]
    %v62 = vld [vmem:[#allocation3 + $0x8] sm:$0xff]
    %v63 = vmul.f32 %v58, %v61
    %v64 = vmul.f32 %v60, %v62
    %66 = vset.pattern.permute.xlu0 0
    %67 = vperm.xlu0 %66, %v53
    %v68 = vpop.permute.xlu0 %67
    %71 = vset.pattern.permute.xlu0 0
    %72 = vperm.xlu0 %71, %v54
    %v73 = vpop.permute.xlu0 %72
    %v75 = vsub.f32 %v37, %v68
    %v76 = vsub.f32 %v38, %v68
    %v77 = vsub.f32 %v39, %v68
    %v78 = vsub.f32 %v40, %v73
    %v79 = vsub.f32 %v41, %v73
    %v80 = vsub.f32 %v42, %v73
    %v81 = vmul.f32 %v75, 1.442695
    %v82 = vpow.pop %v81
    %v83 = vmul.f32 %v76, 1.442695
    %v84 = vpow.pop %v83
    %v85 = vmul.f32 %v77, 1.442695
    %v86 = vpow.pop %v85
    %v87 = vmul.f32 %v78, 1.442695
    %v88 = vpow.pop %v87
    %v89 = vmul.f32 %v79, 1.442695
    %v90 = vpow.pop %v89
    %v91 = vmul.f32 %v80, 1.442695
    %v92 = vpow.pop %v91
    %v93 = vadd.f32 %v82, %v84
    %v94 = vadd.f32 %v93, %v86
    %95 = vadd.xlane.f32.xlu0 %v94
    %v96 = vpop.xlane.xlu0 %95
    %v97 = vadd.f32 %v88, %v90
    %v98 = vadd.f32 %v97, %v92
    %99 = vadd.xlane.f32.xlu0 %v98
    %v100 = vpop.xlane.xlu0 %99
    %v101 = vadd.f32 %v63, %v96
    %v102 = vadd.f32 %v64, %v100
    %vm103 = vcmask 7168
    %104 = vst.msk [vmem:[#allocation3] sm:$0xff] %vm103, %v101
    %105 = vst.msk [vmem:[#allocation3 + $0x8] sm:$0xff] %vm103, %v102
    %106 = vst.msk [vmem:[#allocation2] sm:$0xff] %vm103, %v53
    %107 = vst.msk [vmem:[#allocation2 + $0x8] sm:$0xff] %vm103, %v54
    // Predicated region
    $region14: #{tpu_custom_call.1} parent=1 // pred_check
      %p108 = pneg %p24
    $region15: #{tpu_custom_call.1} parent=1 // pred_check_branch
      %110 = sbr.rel (%p108) target = $region17
    $region16: #{tpu_custom_call.1} parent=1 // pred_region
      %v111 = vld [vmem:[#allocation2] sm:$0xff]
      %v112 = vld [vmem:[#allocation2 + $0x8] sm:$0xff]
      %v113 = vld [vmem:[#allocation3] sm:$0xff]
      %v114 = vld [vmem:[#allocation3 + $0x8] sm:$0xff]
      %v115 = vlog2.pop %v113
      %v116 = vmul.f32 %v115, 0.6931472
      %v117 = vlog2.pop %v114
      %v118 = vmul.f32 %v117, 0.6931472
      %v119 = vadd.f32 %v111, %v116
      %v120 = vadd.f32 %v112, %v118
      %v121 = vld [vmem:[#allocation4] sm:$0xff]
      %v122 = vld [vmem:[#allocation4 + $0x8] sm:$0xff]
      %v123 = vsub.f32 %v119, %v121
      %v124 = vsub.f32 %v120, %v122
      %125 = vst.msk [vmem:[%s1] sm:$0xff] %vm103, %v123
      %126 = vst.msk [vmem:[%s1 + $0x8] sm:$0xff] %vm103, %v124
    $region17: #{tpu_custom_call.1} parent=1 // pred_fallthru
      _
    // Predicated region
    $region18: #{tpu_custom_call.1} parent=1 // pred_check
      _
    $region19: #{tpu_custom_call.1} parent=1 // pred_check_branch
      %128 = sbr.rel (0) target = $region21
    $region20: #{tpu_custom_call.1} parent=1 // pred_region
      _
    $region21: #{tpu_custom_call.1} parent=1 // pred_fallthru
      _
    // Predicated region
    $region22: #{tpu_custom_call.1} parent=1 // pred_check
      _
    $region23: #{tpu_custom_call.1} parent=1 // pred_check_branch
      %130 = sbr.rel (0) target = $region25
    $region24: #{tpu_custom_call.1} parent=1 // pred_region
      _
    $region25: #{tpu_custom_call.1} parent=1 // pred_fallthru
      _
    %131 = vsyncpa [#allocation6], 1

</llo_original>
